<compile_context>
chip_gen: v7x
topology: tpu7x:2x2x1
jax: 0.10.0
libtpu: 0.0.40
codegen_flags: <defaults>
</compile_context>

<pallas_src>
import functools

import jax
import jax.numpy as jnp
from jax import lax
from jax.experimental import pallas as pl
from jax.experimental.pallas import tpu as pltpu

LORENTZ_K = 1.0  # curvature constant of the Lorentz manifold


def _round_up(a, b):
    return ((a + b - 1) // b) * b


def _vmem_capacity_bytes():
    """Physical VMEM per TensorCore; conservative fallback if the query fails."""
    try:
        info = pltpu.get_tpu_info()
        for attr in ("vmem_capacity_bytes", "vmem_size_bytes", "vmem_bytes"):
            val = getattr(info, attr, None)
            if val:
                return int(val)
    except Exception:
        pass
    return 64 * 1024 * 1024  # v7x per-core size; safe lower bound everywhere


def _spec(shape, index_map, *, n_buffers=None):
    """BlockSpec with optional pipeline depth; falls back if unsupported."""
    if n_buffers is not None:
        try:
            return pl.BlockSpec(shape, index_map,
                                pipeline_mode=pl.Buffered(n_buffers))
        except (AttributeError, TypeError):
            pass
    return pl.BlockSpec(shape, index_map)


def _choose_k_tile(in_features, out_features, itemsize, budget):
    """Pick a K tile that divides in_features and is a multiple of 128 so the
    (double-buffered) streamed weight tile fits in ~25% of the VMEM budget.
    Returns in_features (no K tiling) when the full weight is small enough or
    when in_features is not 128-aligned."""
    full_w = out_features * in_features * itemsize
    if full_w <= budget // 4 or in_features % 128 != 0:
        return in_features
    n_chunks = in_features // 128
    for div in range(1, n_chunks + 1):
        if n_chunks % div:
            continue
        tk = in_features // div            # multiple of 128, divides in_features
        if 2 * out_features * tk * itemsize <= budget // 4:
            return tk
    return 128


def _lorentz_epilogue(y, escale, o_ref):
    """y: (bm, out) f32 linear output. Writes the Lorentz-normalized tile."""
    time = jax.nn.sigmoid(y[:, 0:1]) * escale + 1.1
    sq = y * y
    narrow_sumsq = jnp.sum(sq, axis=-1, keepdims=True) - sq[:, 0:1]
    # sqrt((t^2-k)/s) == sqrt(t^2-k) * rsqrt(s); rsqrt/sqrt go to the EUP slot.
    sqrt_factor = jnp.sqrt(time * time - LORENTZ_K) * lax.rsqrt(narrow_sumsq)
    # Single full-width store: column 0 selected with a lane mask (avoids a
    # separate 1-lane masked store -> v5e store-slot pressure).
    col = lax.broadcasted_iota(jnp.int32, y.shape, 1)
    o_ref[...] = jnp.where(col == 0, time, y * sqrt_factor).astype(o_ref.dtype)


def _lorentz_kernel_resident(x_ref, w_ref, b_ref, escale_ref, o_ref):
    # Weight [out, in] fully resident; contract last axes (MXU-native form,
    # same dimension_numbers as the q @ k^T pattern in flash attention).
    y = lax.dot_general(
        x_ref[...], w_ref[...],
        dimension_numbers=(((1,), (1,)), ((), ())),
        preferred_element_type=jnp.float32,
    )
    y = y + b_ref[...].astype(jnp.float32)
    _lorentz_epilogue(y, escale_ref[0], o_ref)


def _lorentz_kernel_ktiled(x_ref, w_ref, b_ref, escale_ref, o_ref, acc_ref):
    k = pl.program_id(1)

    @pl.when(k == 0)
    def _():
        acc_ref[...] = jnp.zeros_like(acc_ref)

    acc_ref[...] += lax.dot_general(
        x_ref[...], w_ref[...],
        dimension_numbers=(((1,), (1,)), ((), ())),
        preferred_element_type=jnp.float32,
    )

    @pl.when(k == pl.num_programs(1) - 1)
    def _():
        y = acc_ref[...] + b_ref[...].astype(jnp.float32)
        _lorentz_epilogue(y, escale_ref[0], o_ref)


@functools.partial(jax.jit, static_argnames=("block_m", "matmul_dtype"))
def lorentz_linear(x, weight, bias, scale, *, block_m=512, matmul_dtype=None):
    """LorentzLinear forward (eval mode).

    x: [..., in_features]; weight: [out, in] (PyTorch layout); bias: [out];
    scale: scalar.  Returns [..., out_features] in x's dtype.

    matmul_dtype: optionally run the MXU contraction in a narrower dtype
    (e.g. jnp.bfloat16) for ~2x throughput on v6e/v7x; accumulation and the
    epilogue remain f32 (expect larger deviation from an f32 reference).
    """
    in_features = x.shape[-1]
    out_features = weight.shape[0]
    lead_shape = x.shape[:-1]

    out_dtype = x.dtype
    compute_dtype = jnp.dtype(matmul_dtype) if matmul_dtype is not None else x.dtype

    x2d = x.reshape(-1, in_features)
    m = x2d.shape[0]
    if x2d.dtype != compute_dtype:
        x2d = x2d.astype(compute_dtype)
    # NOTE: only cast when needed -- a per-call full-weight convert is a pure
    # HBM round trip; store parameters pre-cast to the compute dtype instead.
    w = weight if weight.dtype == compute_dtype else weight.astype(compute_dtype)
    b2d = bias.reshape(1, out_features).astype(jnp.float32)
    # exp(scale) hoisted out of the kernel: one scalar op per call instead of
    # one EUP op + broadcast per grid step.
    escale = jnp.exp(jnp.asarray(scale, jnp.float32)).reshape(1)

    # ---- VMEM budgeting (generation-aware) ---------------------------------
    vmem_cap = _vmem_capacity_bytes()
    vmem_limit = int(vmem_cap * 0.8)        # ~20% headroom for Mosaic scratch
    budget = int(vmem_limit * 0.8)          # budget for our pipelined blocks

    in_itemsize = jnp.dtype(compute_dtype).itemsize
    out_itemsize = jnp.dtype(out_dtype).itemsize

    tk = _choose_k_tile(in_features, out_features, in_itemsize, budget)
    grid_k = in_features // tk
    w_bufs = 1 if grid_k == 1 else 2        # invariant weight is single-buffered

    fixed_bytes = w_bufs * out_features * tk * in_itemsize + out_features * 4
    per_row_bytes = (2 * tk * in_itemsize            # x block, double-buffered
                     + 2 * out_features * out_itemsize   # out block, double-buffered
                     + out_features * 4              # f32 accumulator scratch
                     + 2 * out_features * 4)         # f32 epilogue temporaries
    bm_cap = (budget - fixed_bytes) // per_row_bytes
    bm_cap = max(8, (bm_cap // 8) * 8)
    bm = max(8, min(_round_up(block_m, 8), bm_cap, _round_up(m, 8)))
    # Keep >= 2 M steps so both v7x TensorCores get work ("parallel" axes are
    # sharded across cores); harmless elsewhere.
    if m > 8 and pl.cdiv(m, bm) < 2:
        bm = max(8, _round_up(pl.cdiv(m, 2), 8))
    grid_m = pl.cdiv(m, bm)                 # ragged last block clipped by Pallas

    # ---- Cost estimate ------------------------------------------------------
    w_read_bytes = out_features * in_features * in_itemsize * (1 if grid_k == 1 else grid_m)
    cost = pl.CostEstimate(
        flops=2 * m * in_features * out_features + 10 * m * out_features,
        transcendentals=3 * m,
        bytes_accessed=(m * in_features * in_itemsize
                        + w_read_bytes
                        + out_features * 4 + 4
                        + m * out_features * out_itemsize),
    )

    # ---- Grid / specs --------------------------------------------------------
    if grid_k == 1:
        kernel = _lorentz_kernel_resident
        grid_spec = pltpu.PrefetchScalarGridSpec(
            num_scalar_prefetch=0,
            grid=(grid_m,),
            in_specs=[
                _spec((bm, in_features), lambda i: (i, 0)),
                # Grid-invariant weight / bias: fetched once, single-buffered.
                _spec((out_features, in_features), lambda i: (0, 0), n_buffers=1),
                _spec((1, out_features), lambda i: (0, 0), n_buffers=1),
                pl.BlockSpec(memory_space=pltpu.MemorySpace.SMEM),
            ],
            out_specs=pl.BlockSpec((bm, out_features), lambda i: (i, 0)),
        )
        dim_sem = ("parallel",)
    else:
        kernel = _lorentz_kernel_ktiled
        grid_spec = pltpu.PrefetchScalarGridSpec(
            num_scalar_prefetch=0,
            grid=(grid_m, grid_k),
            in_specs=[
                _spec((bm, tk), lambda i, k: (i, k)),
                _spec((out_features, tk), lambda i, k: (0, k)),   # streamed K tiles
                _spec((1, out_features), lambda i, k: (0, 0), n_buffers=1),
                pl.BlockSpec(memory_space=pltpu.MemorySpace.SMEM),
            ],
            out_specs=pl.BlockSpec((bm, out_features), lambda i, k: (i, 0)),
            scratch_shapes=[pltpu.VMEM((bm, out_features), jnp.float32)],
        )
        dim_sem = ("parallel", "arbitrary")

    out2d = pl.pallas_call(
        kernel,
        out_shape=jax.ShapeDtypeStruct((m, out_features), out_dtype),
        grid_spec=grid_spec,
        compiler_params=pltpu.CompilerParams(
            dimension_semantics=dim_sem,
            vmem_limit_bytes=int(vmem_limit),
        ),
        cost_estimate=cost,
    )(x2d, w, b2d, escale)

    return out2d.reshape(*lead_shape, out_features)


def init_lorentz_linear_params(key, in_features, out_features):
    """Deterministic init mirroring LorentzLinear.reset_parameters()."""
    stdv = 0.02
    w = jax.random.uniform(key, (out_features, in_features),
                           minval=-stdv, maxval=stdv, dtype=jnp.float32)
    # for idx in range(0, in_features, step=in_features): weight[:, idx] = 0
    w = w.at[:, 0].set(0.0)
    b = jnp.zeros((out_features,), jnp.float32)
    scale = jnp.asarray(2.3, jnp.float32)
    return w, b, scale


def _reference(x, weight, bias, scale):
    """Pure-JAX reference of the PyTorch forward (eval mode)."""
    y = x @ weight.T + bias
    x_narrow = y[..., 1:]
    time = jax.nn.sigmoid(y[..., 0:1]) * jnp.exp(scale) + 1.1
    factor = (time * time - LORENTZ_K) / jnp.sum(
        x_narrow * x_narrow, axis=-1, keepdims=True)
    return jnp.concatenate([time, x_narrow * jnp.sqrt(factor)], axis=-1)


if __name__ == "__main__":
    key = jax.random.PRNGKey(0)
    k_w, k_x = jax.random.split(key)

    batch, seq, in_features, out_features = 2, 8, 32, 32
    weight, bias, scale = init_lorentz_linear_params(k_w, in_features, out_features)
    x = jax.random.normal(k_x, (batch, seq, in_features), dtype=jnp.float32)

    out = lorentz_linear(x, weight, bias, scale)
    out = jax.block_until_ready(out)

    ref = _reference(x, weight, bias, scale)
    assert out.shape == (batch, seq, out_features)
    # Tolerance covers the TPU MXU's default (reduced-precision) f32 passes and
    # the mathematically-equivalent rsqrt / sum-minus-col0 epilogue refactor.
    assert jnp.allclose(out, ref, atol=2e-3, rtol=2e-3), "mismatch vs reference"

    print("KERNEL_OK")
</pallas_src>

<mosaic_0001>
module attributes {stable_mosaic.version = 11 : i64} {
  func.func @_lorentz_kernel_resident(%arg0: i32, %arg1: memref<8x32xf32, #tpu.memory_space<vmem>>, %arg2: memref<32x32xf32, #tpu.memory_space<vmem>>, %arg3: memref<1x32xf32, #tpu.memory_space<vmem>>, %arg4: memref<1xf32, #tpu.memory_space<smem>>, %arg5: memref<8x32xf32, #tpu.memory_space<vmem>>) attributes {dimension_semantics = [#tpu.dimension_semantics<parallel>], iteration_bounds = array<i64: 2>, scalar_prefetch = 0 : i64, scratch_operands = 0 : i64, tpu.core_type = #tpu.core_type<tc>, window_params = [{transform_indices = @transform_0, window_bounds = array<i64: 8, 32>}, {pipeline_mode = #tpu.pipeline_mode<synchronous>, transform_indices = @transform_1, window_bounds = array<i64: 32, 32>}, {pipeline_mode = #tpu.pipeline_mode<synchronous>, transform_indices = @transform_2, window_bounds = array<i64: 1, 32>}, {transform_indices = @transform_3, window_bounds = array<i64: 1>}, {transform_indices = @transform_4, window_bounds = array<i64: 8, 32>}]} {
    %c0 = arith.constant 0 : index
    %c0_0 = arith.constant 0 : index
    %0 = vector.load %arg1[%c0, %c0_0] : memref<8x32xf32, #tpu.memory_space<vmem>>, vector<8x32xf32>
    %c0_1 = arith.constant 0 : index
    %c0_2 = arith.constant 0 : index
    %1 = vector.load %arg2[%c0_1, %c0_2] : memref<32x32xf32, #tpu.memory_space<vmem>>, vector<32x32xf32>
    %cst = arith.constant dense<0.000000e+00> : vector<8x32xf32>
    %2 = tpu.matmul %0, %1, %cst {dimension_numbers = #tpu.dot_dimension_numbers<[1], [1], [0], [0], [0, 0, 1, 0], [], []>} : vector<8x32xf32>, vector<32x32xf32>, vector<8x32xf32> -> vector<8x32xf32>
    %c0_3 = arith.constant 0 : index
    %c0_4 = arith.constant 0 : index
    %3 = vector.load %arg3[%c0_3, %c0_4] : memref<1x32xf32, #tpu.memory_space<vmem>>, vector<1x32xf32>
    %4 = vector.broadcast %3 : vector<1x32xf32> to vector<8x32xf32>
    %5 = arith.addf %2, %4 : vector<8x32xf32>
    %c0_5 = arith.constant 0 : index
    %6 = memref.load %arg4[%c0_5] : memref<1xf32, #tpu.memory_space<smem>>
    %7 = vector.extract_strided_slice %5 {offsets = [0, 0], sizes = [8, 1], strides = [1, 1]} : vector<8x32xf32> to vector<8x1xf32>
    %8 = arith.negf %7 : vector<8x1xf32>
    %9 = math.exp %8 : vector<8x1xf32>
    %cst_6 = arith.constant 1.000000e+00 : f32
    %10 = vector.broadcast %cst_6 : f32 to vector<8x1xf32>
    %11 = arith.addf %10, %9 : vector<8x1xf32>
    %12 = arith.divf %10, %11 : vector<8x1xf32>
    %13 = vector.broadcast %6 : f32 to vector<8x1xf32>
    %14 = arith.mulf %12, %13 : vector<8x1xf32>
    %cst_7 = arith.constant 1.100000e+00 : f32
    %15 = vector.broadcast %cst_7 : f32 to vector<8x1xf32>
    %16 = arith.addf %14, %15 : vector<8x1xf32>
    %17 = arith.mulf %5, %5 : vector<8x32xf32>
    %cst_8 = arith.constant dense<0.000000e+00> : vector<8xf32>
    %18 = vector.multi_reduction <add>, %17, %cst_8 [1] : vector<8x32xf32> to vector<8xf32>
    %19 = vector.shape_cast %18 : vector<8xf32> to vector<8x1xf32>
    %20 = vector.extract_strided_slice %17 {offsets = [0, 0], sizes = [8, 1], strides = [1, 1]} : vector<8x32xf32> to vector<8x1xf32>
    %21 = arith.subf %19, %20 : vector<8x1xf32>
    %22 = arith.mulf %16, %16 : vector<8x1xf32>
    %cst_9 = arith.constant 1.000000e+00 : f32
    %23 = vector.broadcast %cst_9 : f32 to vector<8x1xf32>
    %24 = arith.subf %22, %23 : vector<8x1xf32>
    %25 = math.sqrt %24 : vector<8x1xf32>
    %26 = math.rsqrt %21 : vector<8x1xf32>
    %27 = arith.mulf %25, %26 : vector<8x1xf32>
    %28 = tpu.iota {dimensions = array<i32: 1>} : vector<8x32xi32>
    %c0_i32 = arith.constant 0 : i32
    %29 = vector.broadcast %c0_i32 : i32 to vector<8x32xi32>
    %30 = arith.cmpi eq, %28, %29 : vector<8x32xi32>
    %31 = vector.broadcast %27 : vector<8x1xf32> to vector<8x32xf32>
    %32 = arith.mulf %5, %31 : vector<8x32xf32>
    %33 = vector.shape_cast %16 : vector<8x1xf32> to vector<8x1xf32>
    %34 = vector.broadcast %33 : vector<8x1xf32> to vector<8x32xf32>
    %35 = arith.select %30, %34, %32 : vector<8x32xi1>, vector<8x32xf32>
    %c0_10 = arith.constant 0 : index
    %c0_11 = arith.constant 0 : index
    %36 = vector.load %arg5[%c0_10, %c0_11] : memref<8x32xf32, #tpu.memory_space<vmem>>, vector<8x32xf32>
    tpu.vector_store %arg5[%c0_10, %c0_11], %35 {strides = array<i32>} : memref<8x32xf32, #tpu.memory_space<vmem>>, vector<8x32xf32>,
    return
  }
  func.func @transform_0(%arg0: i32) -> (i32, i32) {
    %c0_i32 = arith.constant 0 : i32
    %c0_i32_0 = arith.constant 0 : i32
    return %arg0, %c0_i32 : i32, i32
  }
  func.func @transform_1(%arg0: i32) -> (i32, i32) {
    %c0_i32 = arith.constant 0 : i32
    %c0_i32_0 = arith.constant 0 : i32
    %c0_i32_1 = arith.constant 0 : i32
    return %c0_i32, %c0_i32_0 : i32, i32
  }
  func.func @transform_2(%arg0: i32) -> (i32, i32) {
    %c0_i32 = arith.constant 0 : i32
    %c0_i32_0 = arith.constant 0 : i32
    %c0_i32_1 = arith.constant 0 : i32
    return %c0_i32, %c0_i32_0 : i32, i32
  }
  func.func @transform_3(%arg0: i32) -> i32 {
    %c0_i32 = arith.constant 0 : i32
    %c0_i32_0 = arith.constant 0 : i32
    return %c0_i32 : i32
  }
  func.func @transform_4(%arg0: i32) -> (i32, i32) {
    %c0_i32 = arith.constant 0 : i32
    %c0_i32_0 = arith.constant 0 : i32
    return %arg0, %c0_i32 : i32, i32
  }
}

</mosaic_0001>

<llo_original>
// kernel: lorentz_linear.1
$region0: #{lorentz_linear.1}
  #allocation0 [shape = 'u32[]', space=smem, size = 0x4, offset = 0x4, fixed_abs, tag = 'smem constant byte address 0x4 - core index']
  #allocation1 [shape = 'u32[144,128]{1,0:T(1,128)}', space=vmem, size = 0x12000, scoped, tag = 'internal scratch']
  #allocation2 [shape = 'f32[1]{0:T(128)S(6)}', space=smem, size = 0x200, scoped, tag = 'scoped memory for lorentz_linear.1']
  %s0 = inlined_call_operand.vmem [shape: f32[16,32], index: 0, kind: input, shape index: {}]
  %s1 = inlined_call_operand.hbm [shape: f32[32,32], index: 1, kind: input, shape index: {}]
  %s2 = inlined_call_operand.vmem [shape: f32[1,32], index: 2, kind: input, shape index: {}]
  %s3 = inlined_call_operand.<no memory space> [shape: f32[1], index: 3, kind: input, shape index: {}]
  %s4 = inlined_call_operand.hbm [shape: f32[16,32], index: 4, kind: output, shape index: {}]
  %s5 = sld [smem:[#allocation0]]
  $region53: #{lorentz_linear.1} parent=0
    _
  %s7 = ssub.s32 1, %s5
  %s8 = scalar_select 0, %s7, %s5
  %9 = sst [smem:[#allocation2]] %s3
  $region1: #{lorentz_linear.1} parent=0
    #allocation3 [shape = 'u8[16384]{0}', space=vmem, size = 0x4000, scoped, tag = 'input window, operand 1, single buffered']
    #allocation4 [shape = 's32[2]{0}', space=sflag, size = 0x8, scoped, tag = 'scoped memory for lorentz_linear.1']
    #allocation5 [shape = 's32[2]{0}', space=sflag, size = 0x8, scoped, tag = 'scoped memory for lorentz_linear.1']
    #allocation6 [shape = 'u8[8192]{0}', space=vmem, size = 0x2000, scoped, tag = 'output window, operand 0']
    %10 = vsyncpa [#allocation4], 0
    %11 = vsyncpa [#allocation5], 0
    %s12 = scalar_lea.sflag [#allocation5], 1
    %13 = vsyncpa %s12, 0
    loop: start=0, step=1, limit=4
    $region2: #{lorentz_linear.1} parent=1 // loop_pre_header
      _
    $region3: #{lorentz_linear.1} parent=1 // loop_header
      %s15 = sphi 0, %s19
      %p16 = scmp.ge.s32.totalorder %s15, 4
      %s25 = sphi 0, %s27
      %s28 = sphi 0, %s25
      %s29 = sphi 0, %s28
      %s45 = sphi 0, %s29
      %s49 = sphi 0, %s49
      %s51 = sphi 0, %s49
      %s52 = sphi 0, %s51
      %s66 = sphi 0, %s52
      %s70 = sphi 0, %s70
      %s72 = sphi 0, %s70
      %s73 = sphi 0, %s72
      %s87 = sphi 0, %s73
      %s91 = sphi 0, %s91
      %s93 = sphi 0, %s91
      %s94 = sphi 0, %s93
      %s108 = sphi 0, %s94
      %s114 = sphi 0, %s116
      %s117 = sphi 0, %s114
      %s118 = sphi 0, %s117
      %s134 = sphi 0, %s118
    $region4: #{lorentz_linear.1} parent=1 // loop_header_branch
      %18 = sbr.rel (%p16) target = $region8
    $region5: #{lorentz_linear.1} parent=1 // loop_body
      %s20 = ssub.s32 %s15, 1
      %s21 = ssub.s32 %s15, 2
      %s22 = sadd.s32 %s15, 1
      %s23 = ssub.s32 %s15, %s22
      %p24 = scmp.eq.s32.totalorder %s23, 0
      %s26 = sadd.s32 %s25, 1
      %s27 = scalar_select %p24, %s25, %s26
      %p30 = pneg %p24
      %p31 = scmp.eq.s32.totalorder %s15, 1
      %p32 = por %p30, %p31
      %p33 = scmp.ne.s32.totalorder %s25, %s28
      %p34 = scmp.eq.s32.totalorder %s15, 0
      %p35 = por %p33, %p34
      %p36 = scmp.ne.s32.totalorder %s25, %s28
      %p37 = scmp.eq.s32.totalorder %s20, 1
      %p38 = por %p36, %p37
      %p39 = scmp.ne.s32.totalorder %s28, %s29
      %p40 = scmp.eq.s32.totalorder %s20, 0
      %p41 = por %p39, %p40
      %p42 = scmp.ne.s32.totalorder %s28, %s29
      %p43 = scmp.eq.s32.totalorder %s21, 1
      %p44 = por %p42, %p43
      %p46 = scmp.ne.s32.totalorder %s29, %s45
      %p47 = scmp.eq.s32.totalorder %s21, 0
      %p48 = por %p46, %p47
      %s50 = sadd.s32 %s49, 1
      %p53 = scmp.eq.s32.totalorder %s15, 1
      %p54 = scmp.ne.s32.totalorder %s49, %s51
      %p55 = scmp.eq.s32.totalorder %s15, 0
      %p56 = por %p54, %p55
      %p57 = scmp.ne.s32.totalorder %s49, %s51
      %p58 = scmp.eq.s32.totalorder %s20, 1
      %p59 = por %p57, %p58
      %p60 = scmp.ne.s32.totalorder %s51, %s52
      %p61 = scmp.eq.s32.totalorder %s20, 0
      %p62 = por %p60, %p61
      %p63 = scmp.ne.s32.totalorder %s51, %s52
      %p64 = scmp.eq.s32.totalorder %s21, 1
      %p65 = por %p63, %p64
      %p67 = scmp.ne.s32.totalorder %s52, %s66
      %p68 = scmp.eq.s32.totalorder %s21, 0
      %p69 = por %p67, %p68
      %s71 = sadd.s32 %s70, 1
      %p74 = scmp.eq.s32.totalorder %s15, 1
      %p75 = scmp.ne.s32.totalorder %s70, %s72
      %p76 = scmp.eq.s32.totalorder %s15, 0
      %p77 = por %p75, %p76
      %p78 = scmp.ne.s32.totalorder %s70, %s72
      %p79 = scmp.eq.s32.totalorder %s20, 1
      %p80 = por %p78, %p79
      %p81 = scmp.ne.s32.totalorder %s72, %s73
      %p82 = scmp.eq.s32.totalorder %s20, 0
      %p83 = por %p81, %p82
      %p84 = scmp.ne.s32.totalorder %s72, %s73
      %p85 = scmp.eq.s32.totalorder %s21, 1
      %p86 = por %p84, %p85
      %p88 = scmp.ne.s32.totalorder %s73, %s87
      %p89 = scmp.eq.s32.totalorder %s21, 0
      %p90 = por %p88, %p89
      %s92 = sadd.s32 %s91, 1
      %p95 = scmp.eq.s32.totalorder %s15, 1
      %p96 = scmp.ne.s32.totalorder %s91, %s93
      %p97 = scmp.eq.s32.totalorder %s15, 0
      %p98 = por %p96, %p97
      %p99 = scmp.ne.s32.totalorder %s91, %s93
      %p100 = scmp.eq.s32.totalorder %s20, 1
      %p101 = por %p99, %p100
      %p102 = scmp.ne.s32.totalorder %s93, %s94
      %p103 = scmp.eq.s32.totalorder %s20, 0
      %p104 = por %p102, %p103
      %p105 = scmp.ne.s32.totalorder %s93, %s94
      %p106 = scmp.eq.s32.totalorder %s21, 1
      %p107 = por %p105, %p106
      %p109 = scmp.ne.s32.totalorder %s94, %s108
      %p110 = scmp.eq.s32.totalorder %s21, 0
      %p111 = por %p109, %p110
      %s112 = ssub.s32 %s15, %s22
      %p113 = scmp.eq.s32.totalorder %s112, 0
      %s115 = sadd.s32 %s114, 1
      %s116 = scalar_select %p113, %s114, %s115
      %p119 = pneg %p113
      %p120 = scmp.eq.s32.totalorder %s15, 1
      %p121 = por %p119, %p120
      %p122 = scmp.ne.s32.totalorder %s114, %s117
      %p123 = scmp.eq.s32.totalorder %s15, 0
      %p124 = por %p122, %p123
      %p125 = scmp.ne.s32.totalorder %s114, %s117
      %p126 = scmp.eq.s32.totalorder %s20, 1
      %p127 = por %p125, %p126
      %p128 = scmp.ne.s32.totalorder %s117, %s118
      %p129 = scmp.eq.s32.totalorder %s20, 0
      %p130 = por %p128, %p129
      %p131 = scmp.ne.s32.totalorder %s117, %s118
      %p132 = scmp.eq.s32.totalorder %s21, 1
      %p133 = por %p131, %p132
      %p135 = scmp.ne.s32.totalorder %s118, %s134
      %p136 = scmp.eq.s32.totalorder %s21, 0
      %p137 = por %p135, %p136
      %p138 = scmp.le.s32.totalorder 1, %s15
      %p139 = scmp.lt.s32.totalorder %s15, 3
      %p140 = pnand %p138, %p139
      %p141 = pneg %p140
      // Predicated region
      $region9: #{lorentz_linear.1} parent=5 // pred_check
        _
      $region10: #{lorentz_linear.1} parent=5 // pred_check_branch
        %143 = sbr.rel (%p140) target = $region12
      $region11: #{lorentz_linear.1} parent=5 // pred_region
        %s144 = ssub.s32 %s15, 1
        // Predicated region
        $region13: #{lorentz_linear.1} parent=11 // pred_check
          %p145 = pneg %p62
        $region14: #{lorentz_linear.1} parent=11 // pred_check_branch
          %147 = sbr.rel (%p145) target = $region16
        $region15: #{lorentz_linear.1} parent=11 // pred_region
          %s149 = ssub.s32 512, 512
          %150 = vsyncadd [#allocation4], %s149
          %s151 = sshll.u32 [#allocation3], 4
          %s152 = int_to_ptr.vmem [resolvable:$true] %s151
          %157 = dma.hbm_to_vmem [thread:$0]  %s1, 512, %s152, [#allocation4], 128, 128, 8
        $region16: #{lorentz_linear.1} parent=11 // pred_fallthru
          _
        // Predicated region
        $region17: #{lorentz_linear.1} parent=11 // pred_check
          %p158 = pneg %p83
        $region18: #{lorentz_linear.1} parent=11 // pred_check_branch
          %160 = sbr.rel (%p158) target = $region20
        $region19: #{lorentz_linear.1} parent=11 // pred_region
          _
        $region20: #{lorentz_linear.1} parent=11 // pred_fallthru
          _
        // Predicated region
        $region21: #{lorentz_linear.1} parent=11 // pred_check
          %p161 = pneg %p104
        $region22: #{lorentz_linear.1} parent=11 // pred_check_branch
          %163 = sbr.rel (%p161) target = $region24
        $region23: #{lorentz_linear.1} parent=11 // pred_region
          _
        $region24: #{lorentz_linear.1} parent=11 // pred_fallthru
          _
      $region12: #{lorentz_linear.1} parent=5 // pred_fallthru
        _
      %p164 = scmp.lt.s32.totalorder %s15, 2
      // Predicated region
      $region25: #{lorentz_linear.1} parent=5 // pred_check
        %p165 = pneg %p164
      $region26: #{lorentz_linear.1} parent=5 // pred_check_branch
        %167 = sbr.rel (%p165) target = $region28
      $region27: #{lorentz_linear.1} parent=5 // pred_region
        // Predicated region
        $region29: #{lorentz_linear.1} parent=27 // pred_check
          %p168 = pneg %p35
        $region30: #{lorentz_linear.1} parent=27 // pred_check_branch
          %170 = sbr.rel (%p168) target = $region32
        $region31: #{lorentz_linear.1} parent=27 // pred_region
          %p171 = scmp.lt.s32.totalorder %s15, 1
          %s172 = scalar_select %p171, %s15, 1
          %s173 = smul.addr %s172, 8
          %s174 = scalar_lea.vmem %s0, %s173
        $region32: #{lorentz_linear.1} parent=27 // pred_fallthru
          _
      $region28: #{lorentz_linear.1} parent=5 // pred_fallthru
        _
      %p175 = scmp.le.s32.totalorder 1, %s15
      %p176 = scmp.lt.s32.totalorder %s15, 3
      %p177 = pnand %p175, %p176
      %p178 = pneg %p177
      // Predicated region
      $region33: #{lorentz_linear.1} parent=5 // pred_check
        _
      $region34: #{lorentz_linear.1} parent=5 // pred_check_branch
        %180 = sbr.rel (%p177) target = $region36
      $region35: #{lorentz_linear.1} parent=5 // pred_region
        %s181 = ssub.s32 %s15, 1
        // Predicated region
        $region37: #{lorentz_linear.1} parent=35 // pred_check
          %p182 = pneg %p62
        $region38: #{lorentz_linear.1} parent=35 // pred_check_branch
          %184 = sbr.rel (%p182) target = $region40
        $region39: #{lorentz_linear.1} parent=35 // pred_region
          %185 = dma.done [#allocation4], 512
        $region40: #{lorentz_linear.1} parent=35 // pred_fallthru
          _
        %p186 = scmp.lt.s32.totalorder %s20, 1
        %s187 = scalar_select %p186, %s20, 1
        %s188 = smul.addr %s187, 8
        %s189 = scalar_lea.vmem %s0, %s188
        %p190 = pneg %p41
        %p191 = pneg %p38
        %p192 = pneg %p62
        %p193 = pneg %p59
        %p194 = pneg %p83
        %p195 = pneg %p80
        %p196 = pneg %p104
        %p197 = pneg %p101
        %p198 = pneg %p130
        %p199 = pneg %p127
        %s200 = sand.u32 %s117, 1
        %s201 = scalar_lea.sflag [#allocation5], %s200
        %s202 = sand.u32 %s117, 1
        %s203 = smul.addr %s202, 8
        %s204 = scalar_lea.vmem [#allocation6], %s203
        %p205 = scmp.lt.s32.totalorder %s20, 1
        %s206 = scalar_select %p205, %s20, 1
        %s207 = smul.addr %s206, 8
        %s208 = scalar_lea.vmem %s0, %s207
        %v209 = vld [vmem:[%s208] sm:$0xff]
        %v210 = vld [vmem:[#allocation3] sm:$0xff]
        %v211 = vld [vmem:[#allocation3 + $0x8] sm:$0xff]
        %v212 = vld [vmem:[#allocation3 + $0x10] sm:$0xff]
        %v213 = vld [vmem:[#allocation3 + $0x18] sm:$0xff]
        %v214 = vld [vmem:[%s2] sm:$0x1]
        %v216 = vlaneseq
        %v217 = vshrl.u32 %v216, 7
        %v218 = vsub.s32 0, %v217
        %v219 = vrot.slane %v214, %v218
        %vm221 = vcmask 261120
        %v223 = vsel %vm221, %v209, 0
        %v226 = vsel %vm221, %v210, 0
        %v229 = vsel %vm221, %v211, 0
        %v232 = vsel %vm221, %v212, 0
        %v235 = vsel %vm221, %v213, 0
        %237 = vmatprep.subr.mxu0 0.0
        %238 = vmatpush1.xpose.msra.mxu0 %v226
        %239 = vmatprep.subr.mxu0 0.0
        %240 = vmatpush1.xpose.msra.mxu0 %v229
        %241 = vmatprep.subr.mxu0 0.0
        %242 = vmatpush1.xpose.msra.mxu0 %v232
        %243 = vmatprep.subr.mxu0 0.0
        %244 = vmatpush1.xpose.msra.mxu0 %v235
        %245 = vmatprep.subr.mxu0 0.0
        %246 = vmatpush1.xpose.msra.mxu0 0.0
        %247 = vmatprep.subr.mxu0 0.0
        %248 = vmatpush1.xpose.msra.mxu0 0.0
        %249 = vmatprep.subr.mxu0 0.0
        %250 = vmatpush1.xpose.msra.mxu0 0.0
        %251 = vmatprep.subr.mxu0 0.0
        %252 = vmatpush1.xpose.msra.mxu0 0.0
        %253 = vmatprep.subr.mxu0 0.0
        %254 = vmatpush1.xpose.msra.mxu0 0.0
        %255 = vmatprep.subr.mxu0 0.0
        %256 = vmatpush1.xpose.msra.mxu0 0.0
        %257 = vmatprep.subr.mxu0 0.0
        %258 = vmatpush1.xpose.msra.mxu0 0.0
        %259 = vmatprep.subr.mxu0 0.0
        %260 = vmatpush1.xpose.msra.mxu0 0.0
        %261 = vmatprep.subr.mxu0 0.0
        %262 = vmatpush1.xpose.msra.mxu0 0.0
        %263 = vmatprep.subr.mxu0 0.0
        %264 = vmatpush1.xpose.msra.mxu0 0.0
        %265 = vmatprep.subr.mxu0 0.0
        %266 = vmatpush1.xpose.msra.mxu0 0.0
        %267 = vmatprep.subr.mxu0 0.0
        %268 = vmatpush1.xpose.msra.mxu0 0.0
        %269 = vmatprep.subr.mxu0 0.0
        %270 = vmatpush1.xpose.msra.mxu0 0.0
        %271 = vmatprep.subr.mxu0 0.0
        %272 = vmatpush1.xpose.msra.mxu0 0.0
        %273 = vmatprep.subr.mxu0 0.0
        %274 = vmatpush1.xpose.msra.mxu0 0.0
        %275 = vmatprep.subr.mxu0 0.0
        %276 = vmatpush1.xpose.msra.mxu0 0.0
        %277 = vmatprep.subr.mxu0 0.0
        %278 = vmatpush1.xpose.msra.mxu0 0.0
        %279 = vmatprep.subr.mxu0 0.0
        %280 = vmatpush1.xpose.msra.mxu0 0.0
        %281 = vmatprep.subr.mxu0 0.0
        %282 = vmatpush1.xpose.msra.mxu0 0.0
        %283 = vmatprep.subr.mxu0 0.0
        %284 = vmatpush1.xpose.msra.mxu0 0.0
        %285 = vmatprep.subr.mxu0 0.0
        %286 = vmatpush1.xpose.msra.mxu0 0.0
        %287 = vmatprep.subr.mxu0 0.0
        %288 = vmatpush1.xpose.msra.mxu0 0.0
        %289 = vmatprep.subr.mxu0 0.0
        %290 = vmatpush1.xpose.msra.mxu0 0.0
        %291 = vmatprep.subr.mxu0 0.0
        %292 = vmatpush1.xpose.msra.mxu0 0.0
        %293 = vmatprep.subr.mxu0 0.0
        %294 = vmatpush1.xpose.msra.mxu0 0.0
        %295 = vmatprep.subr.mxu0 0.0
        %296 = vmatpush1.xpose.msra.mxu0 0.0
        %297 = vmatprep.subr.mxu0 0.0
        %298 = vmatpush1.xpose.msra.mxu0 0.0
        %299 = vmatprep.subr.mxu0 0.0
        %300 = vmatpush1.xpose.msra.mxu0 0.0
        %301 = vmatprep.mubr.f32.mxu0 0.0
        %302 = vmatmul.mubr.f32.gmra.mrb[0].mxu0 %v223
        %v303 = vpop.f32.mrb[0].mxu0
        %v304 = vadd.f32 %v219, %v303
        %v305 = vpop.f32.mrb[0].mxu0
        %306 = vdwg.mxu0
        %s307 = sld [smem:[#allocation2]]
        %v308 = vxor.u32 %v304, 2147483648
        %v309 = vmul.f32 %v308, 1.442695
        %v310 = vpow.pop %v309
        %v311 = vadd.f32 %v310, 1.0
        %v312 = vrcp.pop %v311
        %v313 = vmul.f32 1.0, %v312
        %v314 = vstv %s307
        %v315 = vmul.f32 %v313, %v314
        %v316 = vadd.f32 %v315, 1.1
        %v317 = vmul.f32 %v304, %v304
        %v318 = vsel %vm221, %v317, 0.0
        %319 = vadd.xlane.f32.xlu0 %v318
        %v320 = vpop.xlane.xlu0 %319
        %v321 = vsub.f32 %v320, %v317
        %v322 = vmul.f32 %v316, %v316
        %v323 = vsub.f32 %v322, 1.0
        %v324 = vrsqrt.pop %v323
        %v325 = vmul.f32 %v323, %v324
        %vm326 = vcmp.eq.f32.partialorder %v323, inf
        %v327 = vsel %vm326, %v323, %v325
        %vm328 = vcmp.eq.f32.partialorder %v323, 0.0
        %v329 = vand.u32 %v323, 2147483648
        %v330 = vsel %vm328, %v329, %v327
        %v331 = vrsqrt.pop %v321
        %v332 = vmul.f32 %v330, %v331
        %v333 = vlaneseq
        %v334 = vand.u32 %v333, 127
        %vm335 = vcmp.eq.s32.totalorder %v334, 0
        %337 = vset.pattern.permute.xlu0 0
        %338 = vperm.xlu0 %337, %v332
        %v339 = vpop.permute.xlu0 %338
        %v341 = vmul.f32 %v304, %v339
        %343 = vset.pattern.permute.xlu0 0
        %344 = vperm.xlu0 %343, %v316
        %v345 = vpop.permute.xlu0 %344
        %v347 = vsel %vm335, %v345, %v341
        %348 = vst.msk [vmem:[%s204] sm:$0xff] %vm221, %v347
        %s349 = sand.u32 %s117, 1
        %s350 = scalar_lea.sflag [#allocation5], %s349
        %s351 = sand.u32 %s117, 1
        %s352 = smul.addr %s351, 8
        %s353 = scalar_lea.vmem [#allocation6], %s352
        // Predicated region
        $region41: #{lorentz_linear.1} parent=35 // pred_check
          %p354 = pneg %p127
        $region42: #{lorentz_linear.1} parent=35 // pred_check_branch
          %356 = sbr.rel (%p354) target = $region44
        $region43: #{lorentz_linear.1} parent=35 // pred_region
          %s358 = ssub.s32 128, 128
          %359 = vsyncadd %s350, %s358
          %s360 = smul.addr %s20, 128
          %s361 = scalar_lea.hbm %s4, %s360
          %s363 = sshll.u32 %s353, 4
          %s364 = int_to_ptr.vmem [resolvable:$true] %s363
          %366 = dma.vmem_to_hbm [thread:$0]  %s364, 128, %s361, %s350
        $region44: #{lorentz_linear.1} parent=35 // pred_fallthru
          _
      $region36: #{lorentz_linear.1} parent=5 // pred_fallthru
        _
      %p367 = scmp.le.s32.totalorder 2, %s15
      // Predicated region
      $region45: #{lorentz_linear.1} parent=5 // pred_check
        %p368 = pneg %p367
      $region46: #{lorentz_linear.1} parent=5 // pred_check_branch
        %370 = sbr.rel (%p368) target = $region48
      $region47: #{lorentz_linear.1} parent=5 // pred_region
        %s371 = ssub.s32 %s15, 2
        // Predicated region
        $region49: #{lorentz_linear.1} parent=47 // pred_check
          %p372 = pneg %p133
        $region50: #{lorentz_linear.1} parent=47 // pred_check_branch
          %374 = sbr.rel (%p372) target = $region52
        $region51: #{lorentz_linear.1} parent=47 // pred_region
          %s375 = sand.u32 %s118, 1
          %s376 = scalar_lea.sflag [#allocation5], %s375
          %s377 = sand.u32 %s118, 1
          %s378 = smul.addr %s377, 8
          %s379 = scalar_lea.vmem [#allocation6], %s378
          %380 = dma.done %s376, 128
        $region52: #{lorentz_linear.1} parent=47 // pred_fallthru
          _
      $region48: #{lorentz_linear.1} parent=5 // pred_fallthru
        _
    $region6: #{lorentz_linear.1} parent=1 // loop_footer
      %s19 = sadd.s32 1, %s15
    $region7: #{lorentz_linear.1} parent=1 // loop_footer_branch
      %14 = sbr.rel target = $region3
    $region8: #{lorentz_linear.1} parent=1 // loop_exit
      _
    %381 = vsyncpa [#allocation4], 1
    %s382 = scalar_lea.sflag [#allocation4], 1
    %383 = vsyncpa %s382, 1
    %384 = vsyncpa [#allocation5], 1
    %s385 = scalar_lea.sflag [#allocation5], 1
    %386 = vsyncpa %s385, 1

</llo_original>
